<compile_context>
chip_gen: v6e
topology: v6e:2x2x1
jax: 0.10.0
libtpu: 0.0.40
codegen_flags: <defaults>
</compile_context>

<pallas_src>
import functools

import jax
import jax.numpy as jnp
from jax.experimental import pallas as pl
from jax.experimental.pallas import tpu as pltpu


def _round_up(x: int, m: int) -> int:
    return (x + m - 1) // m * m


# ----------------------------- Pallas kernel ------------------------------- #
def _rnn_assembly_kernel(
    u_ref,        # (TT, TB, Hp)  precomputed input projection chunk
    init_ref,     # (TB, Hp)      initial state (batch block)
    wcat_ref,     # (2*Hp, Hp)    fused recurrent weight [[C - I], [W_blocks]]
    states_ref,   # (TT, TB, Hp)  output states chunk
    state_sc,     # VMEM (TB, Hp) carried state (f32)
    *,
    eul_step: float,
    tt: int,
):
    t_blk = pl.program_id(1)

    # Re-initialize the carried state at the first time block of every batch block.
    @pl.when(t_blk == 0)
    def _():
        state_sc[...] = init_ref[...].astype(jnp.float32)

    w = wcat_ref[...]            # resident across the whole unrolled chunk
    s0 = state_sc[...]

    def step(i, s):
        # One fused MXU matmul per timestep: [s, tanh(s)] @ [[C-I],[W_blocks]]
        z = jnp.concatenate([s, jnp.tanh(s)], axis=-1)               # (TB, 2*Hp)
        ds = jnp.dot(z, w, preferred_element_type=jnp.float32) + u_ref[i]
        s_new = s + eul_step * ds
        states_ref[i] = s_new.astype(states_ref.dtype)
        return s_new

    s_final = jax.lax.fori_loop(0, tt, step, s0, unroll=True)
    state_sc[...] = s_final


# ------------------------------ host wrapper -------------------------------- #
def rnn_assembly_forward(x, init_state, w_in, w_blocks, c_coupling, w_out,
                         eul_step=1e-2, time_block=8, batch_block=None):
    """x: (T, B, F) time-major; returns (output (T,B,O), states (T,B,H))."""
    T, B, F = x.shape
    H = w_blocks.shape[0]
    dtype = x.dtype

    # Lane/sublane-dense padded sizes (exact: padded rows/cols are zero).
    Hp = _round_up(H, 128)
    Bp = _round_up(B, 8)
    TT = max(1, min(int(time_block), T))
    Tp = _round_up(T, TT)
    if batch_block is None:
        TB = Bp
    else:
        TB = _round_up(int(batch_block), 8)
        Bp = _round_up(Bp, TB)

    # --- hoisted input projection (one big parallel matmul, off the serial path)
    # F.linear(x_t, W_in) == x_t @ W_in.T
    u = jnp.einsum("tbf,hf->tbh", x, w_in)                       # (T, B, H)

    # --- fused recurrent weight:  [s, tanh(s)] @ [[C - I], [W_blocks]] --------
    a_mat = c_coupling - jnp.eye(H, dtype=dtype)                 # folds -state in
    a_pad = jnp.zeros((Hp, Hp), dtype=dtype).at[:H, :H].set(a_mat)
    wb_pad = jnp.zeros((Hp, Hp), dtype=dtype).at[:H, :H].set(w_blocks)
    w_cat = jnp.concatenate([a_pad, wb_pad], axis=0)             # (2*Hp, Hp)
    # TODO(synk): for very large H on v7x (64 MiB VMEM) cast w_cat to bf16 or
    # tile its K/N axes; unnecessary at these sizes.

    # --- zero padding keeps the recurrence exact on padded lanes / rows -------
    u_pad = jnp.zeros((Tp, Bp, Hp), dtype=dtype).at[:T, :B, :H].set(u)
    init_pad = jnp.zeros((Bp, Hp), dtype=dtype).at[:B, :H].set(init_state)

    kernel = functools.partial(_rnn_assembly_kernel,
                               eul_step=float(eul_step), tt=TT)

    states_pad = pl.pallas_call(
        kernel,
        out_shape=jax.ShapeDtypeStruct((Tp, Bp, Hp), dtype),
        grid_spec=pltpu.PrefetchScalarGridSpec(
            num_scalar_prefetch=0,
            grid=(Bp // TB, Tp // TT),
            in_specs=[
                pl.BlockSpec((TT, TB, Hp), lambda b, t: (t, b, 0)),   # U chunk
                pl.BlockSpec((TB, Hp), lambda b, t: (b, 0)),          # init state
                pl.BlockSpec((2 * Hp, Hp), lambda b, t: (0, 0)),      # fused weights
            ],
            out_specs=pl.BlockSpec((TT, TB, Hp), lambda b, t: (t, b, 0)),
            scratch_shapes=[pltpu.VMEM((TB, Hp), jnp.float32)],
        ),
        compiler_params=pltpu.CompilerParams(
            # batch blocks independent (megacore-shardable on v7x);
            # time blocks carry the recurrent state -> arbitrary.
            dimension_semantics=("parallel", "arbitrary"),
        ),
    )(u_pad, init_pad, w_cat)

    states = states_pad[:T, :B, :H]
    # --- hoisted readout: one big parallel matmul (does not feed the recurrence)
    output = jnp.einsum("tbh,ho->tbo", states, w_out)
    return output, states


# -------------------------- pure-JAX reference ------------------------------ #
def rnn_assembly_reference(x, init_state, w_in, w_blocks, c_coupling, w_out,
                           eul_step=1e-2):
    def step(s, x_t):
        s_new = s + eul_step * (
            -s + jnp.tanh(s) @ w_blocks + s @ c_coupling + x_t @ w_in.T
        )
        return s_new, s_new

    _, states = jax.lax.scan(step, init_state, x)
    return states @ w_out, states


# ----------------------- deterministic parameter setup ---------------------- #
def build_params(key, block_sizes, input_size, out_size, coupling_topology):
    H = sum(block_sizes)
    offsets = [0]
    for s in block_sizes:
        offsets.append(offsets[-1] + s)

    n_couplings = len(coupling_topology)
    keys = jax.random.split(key, len(block_sizes) + n_couplings + 2)

    # BlockDiagonal: block-diagonal recurrent matrix (constrained_blocks=None)
    w_blocks = jnp.zeros((H, H), dtype=jnp.float32)
    for bi, s in enumerate(block_sizes):
        blk = jax.random.normal(keys[bi], (s, s), dtype=jnp.float32) / jnp.sqrt(s)
        w_blocks = w_blocks.at[offsets[bi]:offsets[bi + 1],
                               offsets[bi]:offsets[bi + 1]].set(blk)

    # SkewAntisymmetricCoupling: C[i-block, j-block] = B_ij, C[j, i] = -B_ij.T
    c_coupling = jnp.zeros((H, H), dtype=jnp.float32)
    for ci, (i, j) in enumerate(coupling_topology):
        cb = jax.random.normal(keys[len(block_sizes) + ci],
                               (block_sizes[i], block_sizes[j]),
                               dtype=jnp.float32) / jnp.sqrt(H)
        c_coupling = c_coupling.at[offsets[i]:offsets[i + 1],
                                   offsets[j]:offsets[j + 1]].set(cb)
        c_coupling = c_coupling.at[offsets[j]:offsets[j + 1],
                                   offsets[i]:offsets[i + 1]].set(-cb.T)

    w_in = jax.random.normal(keys[-2], (input_size, H), dtype=jnp.float32) \
        / jnp.sqrt(H)
    w_out = jax.random.normal(keys[-1], (H, out_size), dtype=jnp.float32) \
        / jnp.sqrt(H)
    return w_in, w_blocks, c_coupling, w_out


# ----------------------------------- main ----------------------------------- #
if __name__ == "__main__":
    block_sizes = [8, 8, 16]            # hidden_size = 32
    H = sum(block_sizes)
    input_size = H                       # exact F.linear semantics (see NOTE above)
    out_size = 16
    T, B = 8, 4
    eul_step = 1e-2
    coupling_topology = [(0, 1), (1, 2), (0, 2)]   # "ring"-like topology

    key = jax.random.PRNGKey(0)
    k_par, k_x = jax.random.split(key)
    w_in, w_blocks, c_coupling, w_out = build_params(
        k_par, block_sizes, input_size, out_size, coupling_topology)

    x = jax.random.normal(k_x, (T, B, input_size), dtype=jnp.float32)
    init_state = jnp.zeros((B, H), dtype=jnp.float32)   # default initial_state

    # time_block=4 -> 2 time chunks: exercises the VMEM state carry across grid steps.
    out, states = rnn_assembly_forward(
        x, init_state, w_in, w_blocks, c_coupling, w_out,
        eul_step=eul_step, time_block=4)
    out = jax.block_until_ready(out)
    states = jax.block_until_ready(states)

    out_ref, states_ref = rnn_assembly_reference(
        x, init_state, w_in, w_blocks, c_coupling, w_out, eul_step)

    assert out.shape == (T, B, out_size) and states.shape == (T, B, H)
    assert jnp.allclose(states, states_ref, atol=1e-5, rtol=1e-5)
    assert jnp.allclose(out, out_ref, atol=1e-5, rtol=1e-5)

    print("KERNEL_OK")
</pallas_src>

<mosaic_0001>
module attributes {stable_mosaic.version = 11 : i64} {
  func.func @_rnn_assembly_kernel(%arg0: i32, %arg1: i32, %arg2: memref<4x8x128xf32, #tpu.memory_space<vmem>>, %arg3: memref<8x128xf32, #tpu.memory_space<vmem>>, %arg4: memref<256x128xf32, #tpu.memory_space<vmem>>, %arg5: memref<4x8x128xf32, #tpu.memory_space<vmem>>, %arg6: memref<8x128xf32, #tpu.memory_space<vmem>>) attributes {dimension_semantics = [#tpu.dimension_semantics<parallel>, #tpu.dimension_semantics<arbitrary>], iteration_bounds = array<i64: 1, 2>, scalar_prefetch = 0 : i64, scratch_operands = 1 : i64, tpu.core_type = #tpu.core_type<tc>, window_params = [{transform_indices = @transform_0, window_bounds = array<i64: 4, 8, 128>}, {transform_indices = @transform_1, window_bounds = array<i64: 8, 128>}, {pipeline_mode = #tpu.pipeline_mode<synchronous>, transform_indices = @transform_2, window_bounds = array<i64: 256, 128>}, {transform_indices = @transform_3, window_bounds = array<i64: 4, 8, 128>}]} {
    %c0_i32 = arith.constant 0 : i32
    %0 = arith.cmpi eq, %arg1, %c0_i32 : i32
    %1 = arith.extui %0 : i1 to i32
    %c0_i32_0 = arith.constant 0 : i32
    %2 = arith.cmpi ne, %1, %c0_i32_0 : i32
    scf.if %2 {
      %c0_30 = arith.constant 0 : index
      %c0_31 = arith.constant 0 : index
      %62 = vector.load %arg3[%c0_30, %c0_31] : memref<8x128xf32, #tpu.memory_space<vmem>>, vector<8x128xf32>
      %c0_32 = arith.constant 0 : index
      %c0_33 = arith.constant 0 : index
      %63 = vector.load %arg6[%c0_32, %c0_33] : memref<8x128xf32, #tpu.memory_space<vmem>>, vector<8x128xf32>
      tpu.vector_store %arg6[%c0_32, %c0_33], %62 {strides = array<i32>} : memref<8x128xf32, #tpu.memory_space<vmem>>, vector<8x128xf32>,
    } else {
    }
    %c0 = arith.constant 0 : index
    %c0_1 = arith.constant 0 : index
    %3 = vector.load %arg4[%c0, %c0_1] : memref<256x128xf32, #tpu.memory_space<vmem>>, vector<256x128xf32>
    %c0_2 = arith.constant 0 : index
    %c0_3 = arith.constant 0 : index
    %4 = vector.load %arg6[%c0_2, %c0_3] : memref<8x128xf32, #tpu.memory_space<vmem>>, vector<8x128xf32>
    %c0_i32_4 = arith.constant 0 : i32
    %5 = math.tanh %4 : vector<8x128xf32>
    %6 = tpu.concatenate %4, %5 in 1 : vector<8x128xf32>, vector<8x128xf32> -> vector<8x256xf32>
    %cst = arith.constant dense<0.000000e+00> : vector<8x128xf32>
    %7 = tpu.matmul %6, %3, %cst {dimension_numbers = #tpu.dot_dimension_numbers<[1], [0], [0], [1], [0, 0, 1, 1], [], []>} : vector<8x256xf32>, vector<256x128xf32>, vector<8x128xf32> -> vector<8x128xf32>
    %8 = arith.index_cast %c0_i32_4 : i32 to index
    %c0_5 = arith.constant 0 : index
    %c0_6 = arith.constant 0 : index
    %9 = vector.load %arg2[%8, %c0_5, %c0_6] : memref<4x8x128xf32, #tpu.memory_space<vmem>>, vector<1x8x128xf32>
    %10 = vector.shape_cast %9 : vector<1x8x128xf32> to vector<8x128xf32>
    %11 = arith.addf %7, %10 : vector<8x128xf32>
    %cst_7 = arith.constant 0.00999999977 : f32
    %12 = vector.broadcast %cst_7 : f32 to vector<8x128xf32>
    %13 = arith.mulf %12, %11 : vector<8x128xf32>
    %14 = arith.addf %4, %13 : vector<8x128xf32>
    %15 = arith.index_cast %c0_i32_4 : i32 to index
    %c0_8 = arith.constant 0 : index
    %c0_9 = arith.constant 0 : index
    %16 = vector.load %arg5[%15, %c0_8, %c0_9] : memref<4x8x128xf32, #tpu.memory_space<vmem>>, vector<1x8x128xf32>
    %17 = vector.shape_cast %16 : vector<1x8x128xf32> to vector<8x128xf32>
    %18 = vector.shape_cast %14 : vector<8x128xf32> to vector<1x8x128xf32>
    tpu.vector_store %arg5[%15, %c0_8, %c0_9], %18 {strides = array<i32>} : memref<4x8x128xf32, #tpu.memory_space<vmem>>, vector<1x8x128xf32>,
    %c1_i32 = arith.constant 1 : i32
    %19 = math.tanh %14 : vector<8x128xf32>
    %20 = tpu.concatenate %14, %19 in 1 : vector<8x128xf32>, vector<8x128xf32> -> vector<8x256xf32>
    %cst_10 = arith.constant dense<0.000000e+00> : vector<8x128xf32>
    %21 = tpu.matmul %20, %3, %cst_10 {dimension_numbers = #tpu.dot_dimension_numbers<[1], [0], [0], [1], [0, 0, 1, 1], [], []>} : vector<8x256xf32>, vector<256x128xf32>, vector<8x128xf32> -> vector<8x128xf32>
    %22 = arith.index_cast %c1_i32 : i32 to index
    %c0_11 = arith.constant 0 : index
    %c0_12 = arith.constant 0 : index
    %23 = vector.load %arg2[%22, %c0_11, %c0_12] : memref<4x8x128xf32, #tpu.memory_space<vmem>>, vector<1x8x128xf32>
    %24 = vector.shape_cast %23 : vector<1x8x128xf32> to vector<8x128xf32>
    %25 = arith.addf %21, %24 : vector<8x128xf32>
    %cst_13 = arith.constant 0.00999999977 : f32
    %26 = vector.broadcast %cst_13 : f32 to vector<8x128xf32>
    %27 = arith.mulf %26, %25 : vector<8x128xf32>
    %28 = arith.addf %14, %27 : vector<8x128xf32>
    %29 = arith.index_cast %c1_i32 : i32 to index
    %c0_14 = arith.constant 0 : index
    %c0_15 = arith.constant 0 : index
    %30 = vector.load %arg5[%29, %c0_14, %c0_15] : memref<4x8x128xf32, #tpu.memory_space<vmem>>, vector<1x8x128xf32>
    %31 = vector.shape_cast %30 : vector<1x8x128xf32> to vector<8x128xf32>
    %32 = vector.shape_cast %28 : vector<8x128xf32> to vector<1x8x128xf32>
    tpu.vector_store %arg5[%29, %c0_14, %c0_15], %32 {strides = array<i32>} : memref<4x8x128xf32, #tpu.memory_space<vmem>>, vector<1x8x128xf32>,
    %c2_i32 = arith.constant 2 : i32
    %33 = math.tanh %28 : vector<8x128xf32>
    %34 = tpu.concatenate %28, %33 in 1 : vector<8x128xf32>, vector<8x128xf32> -> vector<8x256xf32>
    %cst_16 = arith.constant dense<0.000000e+00> : vector<8x128xf32>
    %35 = tpu.matmul %34, %3, %cst_16 {dimension_numbers = #tpu.dot_dimension_numbers<[1], [0], [0], [1], [0, 0, 1, 1], [], []>} : vector<8x256xf32>, vector<256x128xf32>, vector<8x128xf32> -> vector<8x128xf32>
    %36 = arith.index_cast %c2_i32 : i32 to index
    %c0_17 = arith.constant 0 : index
    %c0_18 = arith.constant 0 : index
    %37 = vector.load %arg2[%36, %c0_17, %c0_18] : memref<4x8x128xf32, #tpu.memory_space<vmem>>, vector<1x8x128xf32>
    %38 = vector.shape_cast %37 : vector<1x8x128xf32> to vector<8x128xf32>
    %39 = arith.addf %35, %38 : vector<8x128xf32>
    %cst_19 = arith.constant 0.00999999977 : f32
    %40 = vector.broadcast %cst_19 : f32 to vector<8x128xf32>
    %41 = arith.mulf %40, %39 : vector<8x128xf32>
    %42 = arith.addf %28, %41 : vector<8x128xf32>
    %43 = arith.index_cast %c2_i32 : i32 to index
    %c0_20 = arith.constant 0 : index
    %c0_21 = arith.constant 0 : index
    %44 = vector.load %arg5[%43, %c0_20, %c0_21] : memref<4x8x128xf32, #tpu.memory_space<vmem>>, vector<1x8x128xf32>
    %45 = vector.shape_cast %44 : vector<1x8x128xf32> to vector<8x128xf32>
    %46 = vector.shape_cast %42 : vector<8x128xf32> to vector<1x8x128xf32>
    tpu.vector_store %arg5[%43, %c0_20, %c0_21], %46 {strides = array<i32>} : memref<4x8x128xf32, #tpu.memory_space<vmem>>, vector<1x8x128xf32>,
    %c3_i32 = arith.constant 3 : i32
    %47 = math.tanh %42 : vector<8x128xf32>
    %48 = tpu.concatenate %42, %47 in 1 : vector<8x128xf32>, vector<8x128xf32> -> vector<8x256xf32>
    %cst_22 = arith.constant dense<0.000000e+00> : vector<8x128xf32>
    %49 = tpu.matmul %48, %3, %cst_22 {dimension_numbers = #tpu.dot_dimension_numbers<[1], [0], [0], [1], [0, 0, 1, 1], [], []>} : vector<8x256xf32>, vector<256x128xf32>, vector<8x128xf32> -> vector<8x128xf32>
    %50 = arith.index_cast %c3_i32 : i32 to index
    %c0_23 = arith.constant 0 : index
    %c0_24 = arith.constant 0 : index
    %51 = vector.load %arg2[%50, %c0_23, %c0_24] : memref<4x8x128xf32, #tpu.memory_space<vmem>>, vector<1x8x128xf32>
    %52 = vector.shape_cast %51 : vector<1x8x128xf32> to vector<8x128xf32>
    %53 = arith.addf %49, %52 : vector<8x128xf32>
    %cst_25 = arith.constant 0.00999999977 : f32
    %54 = vector.broadcast %cst_25 : f32 to vector<8x128xf32>
    %55 = arith.mulf %54, %53 : vector<8x128xf32>
    %56 = arith.addf %42, %55 : vector<8x128xf32>
    %57 = arith.index_cast %c3_i32 : i32 to index
    %c0_26 = arith.constant 0 : index
    %c0_27 = arith.constant 0 : index
    %58 = vector.load %arg5[%57, %c0_26, %c0_27] : memref<4x8x128xf32, #tpu.memory_space<vmem>>, vector<1x8x128xf32>
    %59 = vector.shape_cast %58 : vector<1x8x128xf32> to vector<8x128xf32>
    %60 = vector.shape_cast %56 : vector<8x128xf32> to vector<1x8x128xf32>
    tpu.vector_store %arg5[%57, %c0_26, %c0_27], %60 {strides = array<i32>} : memref<4x8x128xf32, #tpu.memory_space<vmem>>, vector<1x8x128xf32>,
    %c4_i32 = arith.constant 4 : i32
    %c0_28 = arith.constant 0 : index
    %c0_29 = arith.constant 0 : index
    %61 = vector.load %arg6[%c0_28, %c0_29] : memref<8x128xf32, #tpu.memory_space<vmem>>, vector<8x128xf32>
    tpu.vector_store %arg6[%c0_28, %c0_29], %56 {strides = array<i32>} : memref<8x128xf32, #tpu.memory_space<vmem>>, vector<8x128xf32>,
    return
  }
  func.func @transform_0(%arg0: i32, %arg1: i32) -> (i32, i32, i32) {
    %c0_i32 = arith.constant 0 : i32
    %c0_i32_0 = arith.constant 0 : i32
    return %arg1, %arg0, %c0_i32 : i32, i32, i32
  }
  func.func @transform_1(%arg0: i32, %arg1: i32) -> (i32, i32) {
    %c0_i32 = arith.constant 0 : i32
    %c0_i32_0 = arith.constant 0 : i32
    return %arg0, %c0_i32 : i32, i32
  }
  func.func @transform_2(%arg0: i32, %arg1: i32) -> (i32, i32) {
    %c0_i32 = arith.constant 0 : i32
    %c0_i32_0 = arith.constant 0 : i32
    %c0_i32_1 = arith.constant 0 : i32
    return %c0_i32, %c0_i32_0 : i32, i32
  }
  func.func @transform_3(%arg0: i32, %arg1: i32) -> (i32, i32, i32) {
    %c0_i32 = arith.constant 0 : i32
    %c0_i32_0 = arith.constant 0 : i32
    return %arg1, %arg0, %c0_i32 : i32, i32, i32
  }
}

</mosaic_0001>

<llo_original>
// kernel: tpu_custom_call.1
$region0: #{tpu_custom_call.1}
  #allocation0 [shape = 'u32[]', space=smem, size = 0x4, offset = 0x4, fixed_abs, tag = 'smem constant byte address 0x4 - core index']
  #allocation1 [shape = 'u32[144,128]{1,0:T(1,128)}', space=vmem, size = 0x12000, scoped, tag = 'internal scratch']
  #allocation2 [shape = 'f32[8,128]{1,0:T(8,128)}', space=vmem, size = 0x1000, scoped, tag = 'scratch operand']
  %s0 = inlined_call_operand.hbm [shape: f32[8,8,128], index: 0, kind: input, shape index: {}]
  %s1 = inlined_call_operand.hbm [shape: f32[8,128], index: 1, kind: input, shape index: {}]
  %s2 = inlined_call_operand.hbm [shape: f32[256,128], index: 2, kind: input, shape index: {}]
  %s3 = inlined_call_operand.hbm [shape: f32[8,8,128], index: 3, kind: output, shape index: {}]
  %s4 = sld [smem:[#allocation0]]
  $region61: #{tpu_custom_call.1} parent=0
    _
  %s6 = ssub.s32 1, %s4
  %s7 = scalar_select 0, %s6, %s4
  $region1: #{tpu_custom_call.1} parent=0
    #allocation3 [shape = 'u8[32768]{0}', space=vmem, size = 0x8000, scoped, tag = 'input window, operand 0']
    #allocation4 [shape = 's32[2]{0}', space=sflag, size = 0x8, scoped, tag = 'scoped memory for tpu_custom_call.1']
    #allocation5 [shape = 's32[2]{0}', space=sflag, size = 0x8, scoped, tag = 'scoped memory for tpu_custom_call.1']
    #allocation6 [shape = 'u8[4096]{0}', space=vmem, size = 0x1000, scoped, tag = 'input window, operand 1, single buffered']
    #allocation7 [shape = 's32[1]{0}', space=sflag, size = 0x4, scoped, tag = 'scoped memory for tpu_custom_call.1']
    #allocation8 [shape = 'u8[131072]{0}', space=vmem, size = 0x20000, scoped, tag = 'input window, operand 2, single buffered']
    #allocation9 [shape = 'u8[32768]{0}', space=vmem, size = 0x8000, scoped, tag = 'output window, operand 0']
    %8 = vsyncpa [#allocation4], 0
    %s9 = scalar_lea.sflag [#allocation4], 1
    %10 = vsyncpa %s9, 0
    %11 = vsyncpa [#allocation7], 0
    %12 = vsyncpa [#allocation5], 0
    %s13 = scalar_lea.sflag [#allocation5], 1
    %14 = vsyncpa %s13, 0
    loop: start=0, step=1, limit=4
    $region2: #{tpu_custom_call.1} parent=1 // loop_pre_header
      _
    $region3: #{tpu_custom_call.1} parent=1 // loop_header
      %s16 = sphi 0, %s20
      %p17 = scmp.ge.s32.totalorder %s16, 4
      %s23 = sphi 0, %s35
      %s24 = sphi 0, %s31
      %s25 = sphi 0, %s23
      %s26 = sphi 0, %s24
      %s27 = sphi 0, %s25
      %s28 = sphi 0, %s26
      %s40 = sphi 0, %s42
      %s43 = sphi 0, %s40
      %s44 = sphi 0, %s43
      %s60 = sphi 0, %s44
      %s66 = sphi 0, %s68
      %s69 = sphi 0, %s66
      %s70 = sphi 0, %s69
      %s86 = sphi 0, %s70
      %s90 = sphi 0, %s90
      %s92 = sphi 0, %s90
      %s93 = sphi 0, %s92
      %s107 = sphi 0, %s93
      %s115 = sphi 0, %s117
      %s118 = sphi 0, %s115
      %s119 = sphi 0, %s118
      %s135 = sphi 0, %s119
    $region4: #{tpu_custom_call.1} parent=1 // loop_header_branch
      %19 = sbr.rel (%p17) target = $region8
    $region5: #{tpu_custom_call.1} parent=1 // loop_body
      %s21 = ssub.s32 %s16, 1
      %s22 = ssub.s32 %s16, 2
      %s29 = sadd.s32 1, %s24
      %p30 = scmp.ge.s32.totalorder %s29, 2
      %s31 = scalar_select %p30, 0, %s29
      %s32 = sadd.s32 1, %s23
      %s33 = scalar_select %p30, %s32, %s23
      %p34 = scmp.ge.s32.totalorder %s33, 1
      %s35 = scalar_select %p34, 0, %s33
      %s36 = ssub.s32 %s24, %s31
      %s37 = ssub.s32 %s23, %s35
      %s38 = sor.u32 %s36, %s37
      %p39 = scmp.eq.s32.totalorder %s38, 0
      %s41 = sadd.s32 %s40, 1
      %s42 = scalar_select %p39, %s40, %s41
      %p45 = pneg %p39
      %p46 = scmp.eq.s32.totalorder %s16, 1
      %p47 = por %p45, %p46
      %p48 = scmp.ne.s32.totalorder %s40, %s43
      %p49 = scmp.eq.s32.totalorder %s16, 0
      %p50 = por %p48, %p49
      %p51 = scmp.ne.s32.totalorder %s40, %s43
      %p52 = scmp.eq.s32.totalorder %s21, 1
      %p53 = por %p51, %p52
      %p54 = scmp.ne.s32.totalorder %s43, %s44
      %p55 = scmp.eq.s32.totalorder %s21, 0
      %p56 = por %p54, %p55
      %p57 = scmp.ne.s32.totalorder %s43, %s44
      %p58 = scmp.eq.s32.totalorder %s22, 1
      %p59 = por %p57, %p58
      %p61 = scmp.ne.s32.totalorder %s44, %s60
      %p62 = scmp.eq.s32.totalorder %s22, 0
      %p63 = por %p61, %p62
      %s64 = ssub.s32 %s23, %s35
      %p65 = scmp.eq.s32.totalorder %s64, 0
      %s67 = sadd.s32 %s66, 1
      %s68 = scalar_select %p65, %s66, %s67
      %p71 = pneg %p65
      %p72 = scmp.eq.s32.totalorder %s16, 1
      %p73 = por %p71, %p72
      %p74 = scmp.ne.s32.totalorder %s66, %s69
      %p75 = scmp.eq.s32.totalorder %s16, 0
      %p76 = por %p74, %p75
      %p77 = scmp.ne.s32.totalorder %s66, %s69
      %p78 = scmp.eq.s32.totalorder %s21, 1
      %p79 = por %p77, %p78
      %p80 = scmp.ne.s32.totalorder %s69, %s70
      %p81 = scmp.eq.s32.totalorder %s21, 0
      %p82 = por %p80, %p81
      %p83 = scmp.ne.s32.totalorder %s69, %s70
      %p84 = scmp.eq.s32.totalorder %s22, 1
      %p85 = por %p83, %p84
      %p87 = scmp.ne.s32.totalorder %s70, %s86
      %p88 = scmp.eq.s32.totalorder %s22, 0
      %p89 = por %p87, %p88
      %s91 = sadd.s32 %s90, 1
      %p94 = scmp.eq.s32.totalorder %s16, 1
      %p95 = scmp.ne.s32.totalorder %s90, %s92
      %p96 = scmp.eq.s32.totalorder %s16, 0
      %p97 = por %p95, %p96
      %p98 = scmp.ne.s32.totalorder %s90, %s92
      %p99 = scmp.eq.s32.totalorder %s21, 1
      %p100 = por %p98, %p99
      %p101 = scmp.ne.s32.totalorder %s92, %s93
      %p102 = scmp.eq.s32.totalorder %s21, 0
      %p103 = por %p101, %p102
      %p104 = scmp.ne.s32.totalorder %s92, %s93
      %p105 = scmp.eq.s32.totalorder %s22, 1
      %p106 = por %p104, %p105
      %p108 = scmp.ne.s32.totalorder %s93, %s107
      %p109 = scmp.eq.s32.totalorder %s22, 0
      %p110 = por %p108, %p109
      %s111 = ssub.s32 %s24, %s31
      %s112 = ssub.s32 %s23, %s35
      %s113 = sor.u32 %s111, %s112
      %p114 = scmp.eq.s32.totalorder %s113, 0
      %s116 = sadd.s32 %s115, 1
      %s117 = scalar_select %p114, %s115, %s116
      %p120 = pneg %p114
      %p121 = scmp.eq.s32.totalorder %s16, 1
      %p122 = por %p120, %p121
      %p123 = scmp.ne.s32.totalorder %s115, %s118
      %p124 = scmp.eq.s32.totalorder %s16, 0
      %p125 = por %p123, %p124
      %p126 = scmp.ne.s32.totalorder %s115, %s118
      %p127 = scmp.eq.s32.totalorder %s21, 1
      %p128 = por %p126, %p127
      %p129 = scmp.ne.s32.totalorder %s118, %s119
      %p130 = scmp.eq.s32.totalorder %s21, 0
      %p131 = por %p129, %p130
      %p132 = scmp.ne.s32.totalorder %s118, %s119
      %p133 = scmp.eq.s32.totalorder %s22, 1
      %p134 = por %p132, %p133
      %p136 = scmp.ne.s32.totalorder %s119, %s135
      %p137 = scmp.eq.s32.totalorder %s22, 0
      %p138 = por %p136, %p137
      %p139 = scmp.le.s32.totalorder 1, %s16
      %p140 = scmp.lt.s32.totalorder %s16, 3
      %p141 = pnand %p139, %p140
      %p142 = pneg %p141
      // Predicated region
      $region9: #{tpu_custom_call.1} parent=5 // pred_check
        _
      $region10: #{tpu_custom_call.1} parent=5 // pred_check_branch
        %144 = sbr.rel (%p141) target = $region12
      $region11: #{tpu_custom_call.1} parent=5 // pred_region
        %s145 = ssub.s32 %s16, 1
        // Predicated region
        $region13: #{tpu_custom_call.1} parent=11 // pred_check
          %p146 = pneg %p82
        $region14: #{tpu_custom_call.1} parent=11 // pred_check_branch
          %148 = sbr.rel (%p146) target = $region16
        $region15: #{tpu_custom_call.1} parent=11 // pred_region
          %s150 = ssub.s32 128, 128
          %151 = vsyncadd [#allocation7], %s150
          %s152 = smul.addr %s25, 128
          %s153 = scalar_lea.hbm %s1, %s152
          %s155 = sshll.u32 [#allocation6], 4
          %s156 = int_to_ptr.vmem [resolvable:$true] %s155
          %158 = dma.hbm_to_vmem [thread:$0]  %s153, 128, %s156, [#allocation7]
        $region16: #{tpu_custom_call.1} parent=11 // pred_fallthru
          _
        // Predicated region
        $region17: #{tpu_custom_call.1} parent=11 // pred_check
          %p159 = pneg %p103
        $region18: #{tpu_custom_call.1} parent=11 // pred_check_branch
          %161 = sbr.rel (%p159) target = $region20
        $region19: #{tpu_custom_call.1} parent=11 // pred_region
          %s163 = ssub.s32 4096, 4096
          %164 = vsyncadd [#allocation7], %s163
          %s165 = sshll.u32 [#allocation8], 4
          %s166 = int_to_ptr.vmem [resolvable:$true] %s165
          %171 = dma.hbm_to_vmem [thread:$0]  %s2, 4096, %s166, [#allocation7], 128, 128, 8
        $region20: #{tpu_custom_call.1} parent=11 // pred_fallthru
          _
      $region12: #{tpu_custom_call.1} parent=5 // pred_fallthru
        _
      %p172 = scmp.lt.s32.totalorder %s16, 2
      // Predicated region
      $region21: #{tpu_custom_call.1} parent=5 // pred_check
        %p173 = pneg %p172
      $region22: #{tpu_custom_call.1} parent=5 // pred_check_branch
        %175 = sbr.rel (%p173) target = $region24
      $region23: #{tpu_custom_call.1} parent=5 // pred_region
        // Predicated region
        $region25: #{tpu_custom_call.1} parent=23 // pred_check
          %p176 = pneg %p50
        $region26: #{tpu_custom_call.1} parent=23 // pred_check_branch
          %178 = sbr.rel (%p176) target = $region28
        $region27: #{tpu_custom_call.1} parent=23 // pred_region
          %s179 = sand.u32 %s40, 1
          %s180 = scalar_lea.sflag [#allocation4], %s179
          %s181 = sand.u32 %s40, 1
          %s182 = smul.addr %s181, 32
          %s183 = scalar_lea.vmem [#allocation3], %s182
          %s184 = smul.u32 4, %s24
          %s186 = ssub.s32 512, 512
          %187 = vsyncadd %s180, %s186
          %s188 = sadd.s32 %s23, %s184
          %s189 = smul.addr %s188, 128
          %s190 = scalar_lea.hbm %s0, %s189
          %s191 = sshll.u32 %s183, 4
          %s192 = int_to_ptr.vmem [resolvable:$true] %s191
          %197 = dma.hbm_to_vmem [thread:$0]  %s190, 512, %s192, %s180, 128, 128, 8
        $region28: #{tpu_custom_call.1} parent=23 // pred_fallthru
          _
      $region24: #{tpu_custom_call.1} parent=5 // pred_fallthru
        _
      %p198 = scmp.le.s32.totalorder 1, %s16
      %p199 = scmp.lt.s32.totalorder %s16, 3
      %p200 = pnand %p198, %p199
      %p201 = pneg %p200
      // Predicated region
      $region29: #{tpu_custom_call.1} parent=5 // pred_check
        _
      $region30: #{tpu_custom_call.1} parent=5 // pred_check_branch
        %203 = sbr.rel (%p200) target = $region32
      $region31: #{tpu_custom_call.1} parent=5 // pred_region
        %s204 = ssub.s32 %s16, 1
        %s205 = sand.u32 %s43, 1
        %s206 = scalar_lea.sflag [#allocation4], %s205
        %s207 = sand.u32 %s43, 1
        %s208 = smul.addr %s207, 32
        %s209 = scalar_lea.vmem [#allocation3], %s208
        // Predicated region
        $region33: #{tpu_custom_call.1} parent=31 // pred_check
          %p210 = pneg %p56
        $region34: #{tpu_custom_call.1} parent=31 // pred_check_branch
          %212 = sbr.rel (%p210) target = $region36
        $region35: #{tpu_custom_call.1} parent=31 // pred_region
          %213 = dma.done %s206, 512
        $region36: #{tpu_custom_call.1} parent=31 // pred_fallthru
          _
        // Predicated region
        $region37: #{tpu_custom_call.1} parent=31 // pred_check
          %p214 = pneg %p82
        $region38: #{tpu_custom_call.1} parent=31 // pred_check_branch
          %216 = sbr.rel (%p214) target = $region40
        $region39: #{tpu_custom_call.1} parent=31 // pred_region
          %217 = dma.done [#allocation7], 128
        $region40: #{tpu_custom_call.1} parent=31 // pred_fallthru
          _
        // Predicated region
        $region41: #{tpu_custom_call.1} parent=31 // pred_check
          %p218 = pneg %p103
        $region42: #{tpu_custom_call.1} parent=31 // pred_check_branch
          %220 = sbr.rel (%p218) target = $region44
        $region43: #{tpu_custom_call.1} parent=31 // pred_region
          %221 = dma.done [#allocation7], 4096
        $region44: #{tpu_custom_call.1} parent=31 // pred_fallthru
          _
        %s222 = sand.u32 %s43, 1
        %s223 = scalar_lea.sflag [#allocation4], %s222
        %s224 = sand.u32 %s43, 1
        %s225 = smul.addr %s224, 32
        %s226 = scalar_lea.vmem [#allocation3], %s225
        %p227 = pneg %p56
        %p228 = pneg %p53
        %p229 = pneg %p82
        %p230 = pneg %p79
        %p231 = pneg %p103
        %p232 = pneg %p100
        %p233 = pneg %p131
        %p234 = pneg %p128
        %s235 = sand.u32 %s118, 1
        %s236 = scalar_lea.sflag [#allocation5], %s235
        %s237 = sand.u32 %s118, 1
        %s238 = smul.addr %s237, 32
        %s239 = scalar_lea.vmem [#allocation9], %s238
        %s240 = smul.u32 4, %s26
        %s241 = smul.u32 4, %s26
        %p242 = scmp.eq.s32.totalorder %s26, 0
        // Predicated region
        $region45: #{tpu_custom_call.1} parent=31 // pred_check
          %p243 = pneg %p242
        $region46: #{tpu_custom_call.1} parent=31 // pred_check_branch
          %245 = sbr.rel (%p243) target = $region48
        $region47: #{tpu_custom_call.1} parent=31 // pred_region
          %v246 = vld [vmem:[#allocation6] sm:$0xff]
          %247 = vst [vmem:[#allocation2] sm:$0xff] %v246
        $region48: #{tpu_custom_call.1} parent=31 // pred_fallthru
          _
        %v248 = vld [vmem:[#allocation8] sm:$0xff]
        %v249 = vld [vmem:[#allocation8 + $0x8] sm:$0xff]
        %v250 = vld [vmem:[#allocation8 + $0x10] sm:$0xff]
        %v251 = vld [vmem:[#allocation8 + $0x18] sm:$0xff]
        %v252 = vld [vmem:[#allocation8 + $0x20] sm:$0xff]
        %v253 = vld [vmem:[#allocation8 + $0x28] sm:$0xff]
        %v254 = vld [vmem:[#allocation8 + $0x30] sm:$0xff]
        %v255 = vld [vmem:[#allocation8 + $0x38] sm:$0xff]
        %v256 = vld [vmem:[#allocation8 + $0x40] sm:$0xff]
        %v257 = vld [vmem:[#allocation8 + $0x48] sm:$0xff]
        %v258 = vld [vmem:[#allocation8 + $0x50] sm:$0xff]
        %v259 = vld [vmem:[#allocation8 + $0x58] sm:$0xff]
        %v260 = vld [vmem:[#allocation8 + $0x60] sm:$0xff]
        %v261 = vld [vmem:[#allocation8 + $0x68] sm:$0xff]
        %v262 = vld [vmem:[#allocation8 + $0x70] sm:$0xff]
        %v263 = vld [vmem:[#allocation8 + $0x78] sm:$0xff]
        %v264 = vld [vmem:[#allocation8 + $0x80] sm:$0xff]
        %v265 = vld [vmem:[#allocation8 + $0x88] sm:$0xff]
        %v266 = vld [vmem:[#allocation8 + $0x90] sm:$0xff]
        %v267 = vld [vmem:[#allocation8 + $0x98] sm:$0xff]
        %v268 = vld [vmem:[#allocation8 + $0xa0] sm:$0xff]
        %v269 = vld [vmem:[#allocation8 + $0xa8] sm:$0xff]
        %v270 = vld [vmem:[#allocation8 + $0xb0] sm:$0xff]
        %v271 = vld [vmem:[#allocation8 + $0xb8] sm:$0xff]
        %v272 = vld [vmem:[#allocation8 + $0xc0] sm:$0xff]
        %v273 = vld [vmem:[#allocation8 + $0xc8] sm:$0xff]
        %v274 = vld [vmem:[#allocation8 + $0xd0] sm:$0xff]
        %v275 = vld [vmem:[#allocation8 + $0xd8] sm:$0xff]
        %v276 = vld [vmem:[#allocation8 + $0xe0] sm:$0xff]
        %v277 = vld [vmem:[#allocation8 + $0xe8] sm:$0xff]
        %v278 = vld [vmem:[#allocation8 + $0xf0] sm:$0xff]
        %v279 = vld [vmem:[#allocation8 + $0xf8] sm:$0xff]
        %v280 = vld [vmem:[#allocation2] sm:$0xff]
        %v281 = vtanh.pop %v280
        %v282 = vld [vmem:[%s209] sm:$0xff]
        %283 = vmatprep.subr.mxu0 0.0
        %284 = vmatpush1.msra.mxu0 %v263
        %285 = vmatprep.subr.mxu0 0.0
        %286 = vmatpush1.msra.mxu0 %v262
        %287 = vmatprep.subr.mxu0 0.0
        %288 = vmatpush1.msra.mxu0 %v261
        %289 = vmatprep.subr.mxu0 0.0
        %290 = vmatpush1.msra.mxu0 %v260
        %291 = vmatprep.subr.mxu0 0.0
        %292 = vmatpush1.msra.mxu0 %v259
        %293 = vmatprep.subr.mxu0 0.0
        %294 = vmatpush1.msra.mxu0 %v258
        %295 = vmatprep.subr.mxu0 0.0
        %296 = vmatpush1.msra.mxu0 %v257
        %297 = vmatprep.subr.mxu0 0.0
        %298 = vmatpush1.msra.mxu0 %v256
        %299 = vmatprep.subr.mxu0 0.0
        %300 = vmatpush1.msra.mxu0 %v255
        %301 = vmatprep.subr.mxu0 0.0
        %302 = vmatpush1.msra.mxu0 %v254
        %303 = vmatprep.subr.mxu0 0.0
        %304 = vmatpush1.msra.mxu0 %v253
        %305 = vmatprep.subr.mxu0 0.0
        %306 = vmatpush1.msra.mxu0 %v252
        %307 = vmatprep.subr.mxu0 0.0
        %308 = vmatpush1.msra.mxu0 %v251
        %309 = vmatprep.subr.mxu0 0.0
        %310 = vmatpush1.msra.mxu0 %v250
        %311 = vmatprep.subr.mxu0 0.0
        %312 = vmatpush1.msra.mxu0 %v249
        %313 = vmatprep.subr.mxu0 0.0
        %314 = vmatpush1.msra.mxu0 %v248
        %315 = vmatprep.subr.mxu0 0.0
        %316 = vmatpush2.msra.mxu0 %v279
        %317 = vmatprep.subr.mxu0 0.0
        %318 = vmatpush2.msra.mxu0 %v278
        %319 = vmatprep.subr.mxu0 0.0
        %320 = vmatpush2.msra.mxu0 %v277
        %321 = vmatprep.subr.mxu0 0.0
        %322 = vmatpush2.msra.mxu0 %v276
        %323 = vmatprep.subr.mxu0 0.0
        %324 = vmatpush2.msra.mxu0 %v275
        %325 = vmatprep.subr.mxu0 0.0
        %326 = vmatpush2.msra.mxu0 %v274
        %327 = vmatprep.subr.mxu0 0.0
        %328 = vmatpush2.msra.mxu0 %v273
        %329 = vmatprep.subr.mxu0 0.0
        %330 = vmatpush2.msra.mxu0 %v272
        %331 = vmatprep.subr.mxu0 0.0
        %332 = vmatpush2.msra.mxu0 %v271
        %333 = vmatprep.subr.mxu0 0.0
        %334 = vmatpush2.msra.mxu0 %v270
        %335 = vmatprep.subr.mxu0 0.0
        %336 = vmatpush2.msra.mxu0 %v269
        %337 = vmatprep.subr.mxu0 0.0
        %338 = vmatpush2.msra.mxu0 %v268
        %339 = vmatprep.subr.mxu0 0.0
        %340 = vmatpush2.msra.mxu0 %v267
        %341 = vmatprep.subr.mxu0 0.0
        %342 = vmatpush2.msra.mxu0 %v266
        %343 = vmatprep.subr.mxu0 0.0
        %344 = vmatpush2.msra.mxu0 %v265
        %345 = vmatprep.subr.mxu0 0.0
        %346 = vmatpush2.msra.mxu0 %v264
        %347 = vmatprep.mubr.f32.mxu0 %v281
        %348 = vmatmul.mubr.f32.gmra.mxu0 %v280
        %v349 = vpop.f32.mrf.mxu0
        %v350 = vadd.f32 %v282, %v349
        %v351 = vpop.f32.mrf.mxu0
        %352 = vdwg.mxu0
        %v353 = vmul.f32 %v350, 0.01
        %v354 = vadd.f32 %v280, %v353
        %355 = vst [vmem:[%s239] sm:$0xff] %v354
        %v356 = vtanh.pop %v354
        %s357 = scalar_lea.vmem %s209, 8 [#allocation3]
        %v358 = vld [vmem:[%s357] sm:$0xff]
        %359 = vmatprep.subr.mxu0 0.0
        %360 = vmatpush1.msra.mxu0 %v263
        %361 = vmatprep.subr.mxu0 0.0
        %362 = vmatpush1.msra.mxu0 %v262
        %363 = vmatprep.subr.mxu0 0.0
        %364 = vmatpush1.msra.mxu0 %v261
        %365 = vmatprep.subr.mxu0 0.0
        %366 = vmatpush1.msra.mxu0 %v260
        %367 = vmatprep.subr.mxu0 0.0
        %368 = vmatpush1.msra.mxu0 %v259
        %369 = vmatprep.subr.mxu0 0.0
        %370 = vmatpush1.msra.mxu0 %v258
        %371 = vmatprep.subr.mxu0 0.0
        %372 = vmatpush1.msra.mxu0 %v257
        %373 = vmatprep.subr.mxu0 0.0
        %374 = vmatpush1.msra.mxu0 %v256
        %375 = vmatprep.subr.mxu0 0.0
        %376 = vmatpush1.msra.mxu0 %v255
        %377 = vmatprep.subr.mxu0 0.0
        %378 = vmatpush1.msra.mxu0 %v254
        %379 = vmatprep.subr.mxu0 0.0
        %380 = vmatpush1.msra.mxu0 %v253
        %381 = vmatprep.subr.mxu0 0.0
        %382 = vmatpush1.msra.mxu0 %v252
        %383 = vmatprep.subr.mxu0 0.0
        %384 = vmatpush1.msra.mxu0 %v251
        %385 = vmatprep.subr.mxu0 0.0
        %386 = vmatpush1.msra.mxu0 %v250
        %387 = vmatprep.subr.mxu0 0.0
        %388 = vmatpush1.msra.mxu0 %v249
        %389 = vmatprep.subr.mxu0 0.0
        %390 = vmatpush1.msra.mxu0 %v248
        %391 = vmatprep.subr.mxu0 0.0
        %392 = vmatpush2.msra.mxu0 %v279
        %393 = vmatprep.subr.mxu0 0.0
        %394 = vmatpush2.msra.mxu0 %v278
        %395 = vmatprep.subr.mxu0 0.0
        %396 = vmatpush2.msra.mxu0 %v277
        %397 = vmatprep.subr.mxu0 0.0
        %398 = vmatpush2.msra.mxu0 %v276
        %399 = vmatprep.subr.mxu0 0.0
        %400 = vmatpush2.msra.mxu0 %v275
        %401 = vmatprep.subr.mxu0 0.0
        %402 = vmatpush2.msra.mxu0 %v274
        %403 = vmatprep.subr.mxu0 0.0
        %404 = vmatpush2.msra.mxu0 %v273
        %405 = vmatprep.subr.mxu0 0.0
        %406 = vmatpush2.msra.mxu0 %v272
        %407 = vmatprep.subr.mxu0 0.0
        %408 = vmatpush2.msra.mxu0 %v271
        %409 = vmatprep.subr.mxu0 0.0
        %410 = vmatpush2.msra.mxu0 %v270
        %411 = vmatprep.subr.mxu0 0.0
        %412 = vmatpush2.msra.mxu0 %v269
        %413 = vmatprep.subr.mxu0 0.0
        %414 = vmatpush2.msra.mxu0 %v268
        %415 = vmatprep.subr.mxu0 0.0
        %416 = vmatpush2.msra.mxu0 %v267
        %417 = vmatprep.subr.mxu0 0.0
        %418 = vmatpush2.msra.mxu0 %v266
        %419 = vmatprep.subr.mxu0 0.0
        %420 = vmatpush2.msra.mxu0 %v265
        %421 = vmatprep.subr.mxu0 0.0
        %422 = vmatpush2.msra.mxu0 %v264
        %423 = vmatprep.mubr.f32.mxu0 %v356
        %424 = vmatmul.mubr.f32.gmra.mxu0 %v354
        %v425 = vpop.f32.mrf.mxu0
        %v426 = vadd.f32 %v358, %v425
        %v427 = vpop.f32.mrf.mxu0
        %428 = vdwg.mxu0
        %v429 = vmul.f32 %v426, 0.01
        %v430 = vadd.f32 %v354, %v429
        %s431 = scalar_lea.vmem %s239, 8 [#allocation9]
        %432 = vst [vmem:[%s431] sm:$0xff] %v430
        %v433 = vtanh.pop %v430
        %s434 = scalar_lea.vmem %s209, 16 [#allocation3]
        %v435 = vld [vmem:[%s434] sm:$0xff]
        %436 = vmatprep.subr.mxu0 0.0
        %437 = vmatpush1.msra.mxu0 %v263
        %438 = vmatprep.subr.mxu0 0.0
        %439 = vmatpush1.msra.mxu0 %v262
        %440 = vmatprep.subr.mxu0 0.0
        %441 = vmatpush1.msra.mxu0 %v261
        %442 = vmatprep.subr.mxu0 0.0
        %443 = vmatpush1.msra.mxu0 %v260
        %444 = vmatprep.subr.mxu0 0.0
        %445 = vmatpush1.msra.mxu0 %v259
        %446 = vmatprep.subr.mxu0 0.0
        %447 = vmatpush1.msra.mxu0 %v258
        %448 = vmatprep.subr.mxu0 0.0
        %449 = vmatpush1.msra.mxu0 %v257
        %450 = vmatprep.subr.mxu0 0.0
        %451 = vmatpush1.msra.mxu0 %v256
        %452 = vmatprep.subr.mxu0 0.0
        %453 = vmatpush1.msra.mxu0 %v255
        %454 = vmatprep.subr.mxu0 0.0
        %455 = vmatpush1.msra.mxu0 %v254
        %456 = vmatprep.subr.mxu0 0.0
        %457 = vmatpush1.msra.mxu0 %v253
        %458 = vmatprep.subr.mxu0 0.0
        %459 = vmatpush1.msra.mxu0 %v252
        %460 = vmatprep.subr.mxu0 0.0
        %461 = vmatpush1.msra.mxu0 %v251
        %462 = vmatprep.subr.mxu0 0.0
        %463 = vmatpush1.msra.mxu0 %v250
        %464 = vmatprep.subr.mxu0 0.0
        %465 = vmatpush1.msra.mxu0 %v249
        %466 = vmatprep.subr.mxu0 0.0
        %467 = vmatpush1.msra.mxu0 %v248
        %468 = vmatprep.subr.mxu0 0.0
        %469 = vmatpush2.msra.mxu0 %v279
        %470 = vmatprep.subr.mxu0 0.0
        %471 = vmatpush2.msra.mxu0 %v278
        %472 = vmatprep.subr.mxu0 0.0
        %473 = vmatpush2.msra.mxu0 %v277
        %474 = vmatprep.subr.mxu0 0.0
        %475 = vmatpush2.msra.mxu0 %v276
        %476 = vmatprep.subr.mxu0 0.0
        %477 = vmatpush2.msra.mxu0 %v275
        %478 = vmatprep.subr.mxu0 0.0
        %479 = vmatpush2.msra.mxu0 %v274
        %480 = vmatprep.subr.mxu0 0.0
        %481 = vmatpush2.msra.mxu0 %v273
        %482 = vmatprep.subr.mxu0 0.0
        %483 = vmatpush2.msra.mxu0 %v272
        %484 = vmatprep.subr.mxu0 0.0
        %485 = vmatpush2.msra.mxu0 %v271
        %486 = vmatprep.subr.mxu0 0.0
        %487 = vmatpush2.msra.mxu0 %v270
        %488 = vmatprep.subr.mxu0 0.0
        %489 = vmatpush2.msra.mxu0 %v269
        %490 = vmatprep.subr.mxu0 0.0
        %491 = vmatpush2.msra.mxu0 %v268
        %492 = vmatprep.subr.mxu0 0.0
        %493 = vmatpush2.msra.mxu0 %v267
        %494 = vmatprep.subr.mxu0 0.0
        %495 = vmatpush2.msra.mxu0 %v266
        %496 = vmatprep.subr.mxu0 0.0
        %497 = vmatpush2.msra.mxu0 %v265
        %498 = vmatprep.subr.mxu0 0.0
        %499 = vmatpush2.msra.mxu0 %v264
        %500 = vmatprep.mubr.f32.mxu0 %v433
        %501 = vmatmul.mubr.f32.gmra.mxu0 %v430
        %v502 = vpop.f32.mrf.mxu0
        %v503 = vadd.f32 %v435, %v502
        %v504 = vpop.f32.mrf.mxu0
        %505 = vdwg.mxu0
        %v506 = vmul.f32 %v503, 0.01
        %v507 = vadd.f32 %v430, %v506
        %s508 = scalar_lea.vmem %s239, 16 [#allocation9]
        %509 = vst [vmem:[%s508] sm:$0xff] %v507
        %v510 = vtanh.pop %v507
        %s511 = scalar_lea.vmem %s209, 24 [#allocation3]
        %v512 = vld [vmem:[%s511] sm:$0xff]
        %513 = vmatprep.subr.mxu0 0.0
        %514 = vmatpush1.msra.mxu0 %v263
        %515 = vmatprep.subr.mxu0 0.0
        %516 = vmatpush1.msra.mxu0 %v262
        %517 = vmatprep.subr.mxu0 0.0
        %518 = vmatpush1.msra.mxu0 %v261
        %519 = vmatprep.subr.mxu0 0.0
        %520 = vmatpush1.msra.mxu0 %v260
        %521 = vmatprep.subr.mxu0 0.0
        %522 = vmatpush1.msra.mxu0 %v259
        %523 = vmatprep.subr.mxu0 0.0
        %524 = vmatpush1.msra.mxu0 %v258
        %525 = vmatprep.subr.mxu0 0.0
        %526 = vmatpush1.msra.mxu0 %v257
        %527 = vmatprep.subr.mxu0 0.0
        %528 = vmatpush1.msra.mxu0 %v256
        %529 = vmatprep.subr.mxu0 0.0
        %530 = vmatpush1.msra.mxu0 %v255
        %531 = vmatprep.subr.mxu0 0.0
        %532 = vmatpush1.msra.mxu0 %v254
        %533 = vmatprep.subr.mxu0 0.0
        %534 = vmatpush1.msra.mxu0 %v253
        %535 = vmatprep.subr.mxu0 0.0
        %536 = vmatpush1.msra.mxu0 %v252
        %537 = vmatprep.subr.mxu0 0.0
        %538 = vmatpush1.msra.mxu0 %v251
        %539 = vmatprep.subr.mxu0 0.0
        %540 = vmatpush1.msra.mxu0 %v250
        %541 = vmatprep.subr.mxu0 0.0
        %542 = vmatpush1.msra.mxu0 %v249
        %543 = vmatprep.subr.mxu0 0.0
        %544 = vmatpush1.msra.mxu0 %v248
        %545 = vmatprep.subr.mxu0 0.0
        %546 = vmatpush2.msra.mxu0 %v279
        %547 = vmatprep.subr.mxu0 0.0
        %548 = vmatpush2.msra.mxu0 %v278
        %549 = vmatprep.subr.mxu0 0.0
        %550 = vmatpush2.msra.mxu0 %v277
        %551 = vmatprep.subr.mxu0 0.0
        %552 = vmatpush2.msra.mxu0 %v276
        %553 = vmatprep.subr.mxu0 0.0
        %554 = vmatpush2.msra.mxu0 %v275
        %555 = vmatprep.subr.mxu0 0.0
        %556 = vmatpush2.msra.mxu0 %v274
        %557 = vmatprep.subr.mxu0 0.0
        %558 = vmatpush2.msra.mxu0 %v273
        %559 = vmatprep.subr.mxu0 0.0
        %560 = vmatpush2.msra.mxu0 %v272
        %561 = vmatprep.subr.mxu0 0.0
        %562 = vmatpush2.msra.mxu0 %v271
        %563 = vmatprep.subr.mxu0 0.0
        %564 = vmatpush2.msra.mxu0 %v270
        %565 = vmatprep.subr.mxu0 0.0
        %566 = vmatpush2.msra.mxu0 %v269
        %567 = vmatprep.subr.mxu0 0.0
        %568 = vmatpush2.msra.mxu0 %v268
        %569 = vmatprep.subr.mxu0 0.0
        %570 = vmatpush2.msra.mxu0 %v267
        %571 = vmatprep.subr.mxu0 0.0
        %572 = vmatpush2.msra.mxu0 %v266
        %573 = vmatprep.subr.mxu0 0.0
        %574 = vmatpush2.msra.mxu0 %v265
        %575 = vmatprep.subr.mxu0 0.0
        %576 = vmatpush2.msra.mxu0 %v264
        %577 = vmatprep.mubr.f32.mxu0 %v510
        %578 = vmatmul.mubr.f32.gmra.mxu0 %v507
        %v579 = vpop.f32.mrf.mxu0
        %v580 = vadd.f32 %v512, %v579
        %v581 = vpop.f32.mrf.mxu0
        %582 = vdwg.mxu0
        %v583 = vmul.f32 %v580, 0.01
        %v584 = vadd.f32 %v507, %v583
        %s585 = scalar_lea.vmem %s239, 24 [#allocation9]
        %586 = vst [vmem:[%s585] sm:$0xff] %v584
        %587 = vst [vmem:[#allocation2] sm:$0xff] %v584
        %s588 = sand.u32 %s118, 1
        %s589 = scalar_lea.sflag [#allocation5], %s588
        %s590 = sand.u32 %s118, 1
        %s591 = smul.addr %s590, 32
        %s592 = scalar_lea.vmem [#allocation9], %s591
        // Predicated region
        $region49: #{tpu_custom_call.1} parent=31 // pred_check
          %p593 = pneg %p128
        $region50: #{tpu_custom_call.1} parent=31 // pred_check_branch
          %595 = sbr.rel (%p593) target = $region52
        $region51: #{tpu_custom_call.1} parent=31 // pred_region
          %s596 = smul.u32 4, %s26
          %s598 = ssub.s32 512, 512
          %599 = vsyncadd %s589, %s598
          %s600 = sadd.s32 %s25, %s596
          %s601 = smul.addr %s600, 128
          %s602 = scalar_lea.hbm %s3, %s601
          %s603 = sshll.u32 %s592, 4
          %s604 = int_to_ptr.vmem [resolvable:$true] %s603
          %609 = dma.vmem_to_hbm [thread:$0]  %s604, 512, %s602, %s589, 128, 128, 8
        $region52: #{tpu_custom_call.1} parent=31 // pred_fallthru
          _
      $region32: #{tpu_custom_call.1} parent=5 // pred_fallthru
        _
      %p610 = scmp.le.s32.totalorder 2, %s16
      // Predicated region
      $region53: #{tpu_custom_call.1} parent=5 // pred_check
        %p611 = pneg %p610
      $region54: #{tpu_custom_call.1} parent=5 // pred_check_branch
        %613 = sbr.rel (%p611) target = $region56
      $region55: #{tpu_custom_call.1} parent=5 // pred_region
        %s614 = ssub.s32 %s16, 2
        // Predicated region
        $region57: #{tpu_custom_call.1} parent=55 // pred_check
          %p615 = pneg %p134
        $region58: #{tpu_custom_call.1} parent=55 // pred_check_branch
          %617 = sbr.rel (%p615) target = $region60
        $region59: #{tpu_custom_call.1} parent=55 // pred_region
          %s618 = sand.u32 %s119, 1
          %s619 = scalar_lea.sflag [#allocation5], %s618
          %s620 = sand.u32 %s119, 1
          %s621 = smul.addr %s620, 32
          %s622 = scalar_lea.vmem [#allocation9], %s621
          %623 = dma.done %s619, 512
        $region60: #{tpu_custom_call.1} parent=55 // pred_fallthru
          _
      $region56: #{tpu_custom_call.1} parent=5 // pred_fallthru
        _
    $region6: #{tpu_custom_call.1} parent=1 // loop_footer
      %s20 = sadd.s32 1, %s16
    $region7: #{tpu_custom_call.1} parent=1 // loop_footer_branch
      %15 = sbr.rel target = $region3
    $region8: #{tpu_custom_call.1} parent=1 // loop_exit
      _
    %624 = vsyncpa [#allocation4], 1
    %s625 = scalar_lea.sflag [#allocation4], 1
    %626 = vsyncpa %s625, 1
    %627 = vsyncpa [#allocation7], 1
    %628 = vsyncpa [#allocation5], 1
    %s629 = scalar_lea.sflag [#allocation5], 1
    %630 = vsyncpa %s629, 1

</llo_original>
